<compile_context>
chip_gen: v5e
topology: v5e:2x2
jax: 0.10.0
libtpu: 0.0.40
codegen_flags: <defaults>
</compile_context>

<pallas_src>
import jax
import jax.numpy as jnp
from jax.experimental import pallas as pl
from jax.experimental.pallas import tpu as pltpu

IN_FEATURES = 384
OUT_FEATURES = 250
_LANES = 128
OUT_PAD = ((OUT_FEATURES + _LANES - 1) // _LANES) * _LANES  # 256
_BLOCK_M = 256  # M-tile used only when batch is large enough to shard


def _fc1_kernel(x_ref, wq_ref, scale_ref, b_ref, o_ref):
    # x_ref:     (bm, IN)       f32
    # wq_ref:    (IN, OUT_PAD)  int8   (symmetric, per-column scale)
    # scale_ref: (1, OUT_PAD)   f32
    # b_ref:     (1, OUT_PAD)   f32
    # o_ref:     (bm, OUT_PAD)  f32
    x = x_ref[...].astype(jnp.bfloat16)          # bf16 MXU inputs
    w = wq_ref[...].astype(jnp.bfloat16)         # int8 values are exact in bf16
    acc = jnp.dot(x, w, preferred_element_type=jnp.float32)   # f32 accumulation
    # Dequantize after the dot: y[:, j] = scale[j] * sum_k x[k] * w_q[k, j] + b[j]
    y = acc * scale_ref[...] + b_ref[...]
    # Exact sigmoid; exp issues on the EUP slot, divide is cheap at this size.
    o_ref[...] = (1.0 / (1.0 + jnp.exp(-y))).astype(o_ref.dtype)


def prepare_params(w, b):
    """Pack PyTorch-layout params once (NOT per call).

    w: (OUT, IN) f32, b: (OUT,) f32
    -> w_q:     (IN, OUT_PAD) int8   per-column symmetric quantized
       w_scale: (1, OUT_PAD)  f32    dequant scale per output column
       b_p:     (1, OUT_PAD)  f32    zero-padded bias
    """
    w_t = jnp.transpose(w)                                      # (IN, OUT)
    w_t = jnp.pad(w_t, ((0, 0), (0, OUT_PAD - OUT_FEATURES)))   # lane-align OUT
    max_abs = jnp.max(jnp.abs(w_t), axis=0, keepdims=True)      # (1, OUT_PAD)
    w_scale = jnp.where(max_abs > 0, max_abs / 127.0, 1.0).astype(jnp.float32)
    w_q = jnp.clip(jnp.round(w_t / w_scale), -127, 127).astype(jnp.int8)
    b_p = jnp.pad(b, (0, OUT_PAD - OUT_FEATURES)).reshape(1, OUT_PAD)
    return w_q, w_scale, b_p.astype(jnp.float32)


@jax.jit
def fc1_forward(x, w_q, w_scale, b_packed):
    """x: (B, IN) f32 -> sigmoid(x @ W^T + b): (B, OUT) f32."""
    B = x.shape[0]
    cost = pl.CostEstimate(
        flops=2 * B * IN_FEATURES * OUT_PAD,
        transcendentals=B * OUT_PAD,
        bytes_accessed=(w_q.size                      # int8 weight
                        + w_scale.size * 4
                        + b_packed.size * 4
                        + x.size * 4
                        + B * OUT_PAD * 4),
    )

    if B >= 2 * _BLOCK_M and B % _BLOCK_M == 0:
        # Large batch: shard M across cores (v7x megacore) with parallel semantics.
        out_pad = pl.pallas_call(
            _fc1_kernel,
            out_shape=jax.ShapeDtypeStruct((B, OUT_PAD), jnp.float32),
            grid=(B // _BLOCK_M,),
            in_specs=[
                pl.BlockSpec((_BLOCK_M, IN_FEATURES), lambda i: (i, 0)),
                pl.BlockSpec((IN_FEATURES, OUT_PAD), lambda i: (0, 0)),
                pl.BlockSpec((1, OUT_PAD), lambda i: (0, 0)),
                pl.BlockSpec((1, OUT_PAD), lambda i: (0, 0)),
            ],
            out_specs=pl.BlockSpec((_BLOCK_M, OUT_PAD), lambda i: (i, 0)),
            compiler_params=pltpu.CompilerParams(
                dimension_semantics=("parallel",)),
            cost_estimate=cost,
        )(x, w_q, w_scale, b_packed)
    else:
        # Small batch (the common case here): single-shot, everything whole in VMEM,
        # no pipeline bookkeeping.
        out_pad = pl.pallas_call(
            _fc1_kernel,
            out_shape=jax.ShapeDtypeStruct((B, OUT_PAD), jnp.float32),
            in_specs=[
                pl.BlockSpec(memory_space=pltpu.MemorySpace.VMEM),
                pl.BlockSpec(memory_space=pltpu.MemorySpace.VMEM),
                pl.BlockSpec(memory_space=pltpu.MemorySpace.VMEM),
                pl.BlockSpec(memory_space=pltpu.MemorySpace.VMEM),
            ],
            out_specs=pl.BlockSpec(memory_space=pltpu.MemorySpace.VMEM),
            cost_estimate=cost,
        )(x, w_q, w_scale, b_packed)

    # Padded columns 250..255 hold sigmoid(0)=0.5 -- never consume them directly.
    # TODO(synk): if a consumer layer (e.g. fc2) is ever fused into this call,
    # mask/zero the padded columns inside the kernel instead of slicing here.
    return out_pad[:, :OUT_FEATURES]


if __name__ == "__main__":
    BATCH = 8

    key = jax.random.PRNGKey(0)
    kx, kw, kb = jax.random.split(key, 3)

    # Deterministic parameter init (mimics nn.Linear uniform bound = 1/sqrt(in_features)).
    bound = 1.0 / (IN_FEATURES ** 0.5)
    w = jax.random.uniform(kw, (OUT_FEATURES, IN_FEATURES), jnp.float32, -bound, bound)
    b = jax.random.uniform(kb, (OUT_FEATURES,), jnp.float32, -bound, bound)
    x = jax.random.normal(kx, (BATCH, IN_FEATURES), jnp.float32)

    # Pack params once (transpose + pad + int8 quantization happen outside the hot path).
    w_q, w_scale, b_packed = prepare_params(w, b)

    out = fc1_forward(x, w_q, w_scale, b_packed)
    out = jax.block_until_ready(out)

    # Reference in plain JAX (f32). int8 weights + bf16 activations -> loose tolerance.
    ref = jax.nn.sigmoid(x @ w.T + b)
    assert out.shape == (BATCH, OUT_FEATURES)
    assert jnp.allclose(out, ref, atol=1e-2, rtol=0.0), float(jnp.max(jnp.abs(out - ref)))

    print("KERNEL_OK")
</pallas_src>

<mosaic_0001>
module attributes {stable_mosaic.version = 11 : i64} {
  func.func @_fc1_kernel(%arg0: memref<8x384xf32, #tpu.memory_space<vmem>>, %arg1: memref<384x256xi8, #tpu.memory_space<vmem>>, %arg2: memref<1x256xf32, #tpu.memory_space<vmem>>, %arg3: memref<1x256xf32, #tpu.memory_space<vmem>>, %arg4: memref<8x256xf32, #tpu.memory_space<vmem>>) attributes {dimension_semantics = [], scalar_prefetch = 0 : i64, scratch_operands = 0 : i64, tpu.core_type = #tpu.core_type<tc>} {
    %c0 = arith.constant 0 : index
    %c0_0 = arith.constant 0 : index
    %0 = vector.load %arg0[%c0, %c0_0] : memref<8x384xf32, #tpu.memory_space<vmem>>, vector<8x384xf32>
    %1 = arith.truncf %0 : vector<8x384xf32> to vector<8x384xbf16>
    %c0_1 = arith.constant 0 : index
    %c0_2 = arith.constant 0 : index
    %2 = vector.load %arg1[%c0_1, %c0_2] : memref<384x256xi8, #tpu.memory_space<vmem>>, vector<384x256xi8>
    %3 = arith.sitofp %2 : vector<384x256xi8> to vector<384x256xbf16>
    %cst = arith.constant dense<0.000000e+00> : vector<8x256xf32>
    %4 = tpu.matmul %1, %3, %cst {dimension_numbers = #tpu.dot_dimension_numbers<[1], [0], [0], [1], [0, 0, 1, 1], [], []>} : vector<8x384xbf16>, vector<384x256xbf16>, vector<8x256xf32> -> vector<8x256xf32>
    %c0_3 = arith.constant 0 : index
    %c0_4 = arith.constant 0 : index
    %5 = vector.load %arg2[%c0_3, %c0_4] : memref<1x256xf32, #tpu.memory_space<vmem>>, vector<1x256xf32>
    %6 = vector.broadcast %5 : vector<1x256xf32> to vector<8x256xf32>
    %7 = arith.mulf %4, %6 : vector<8x256xf32>
    %c0_5 = arith.constant 0 : index
    %c0_6 = arith.constant 0 : index
    %8 = vector.load %arg3[%c0_5, %c0_6] : memref<1x256xf32, #tpu.memory_space<vmem>>, vector<1x256xf32>
    %9 = vector.broadcast %8 : vector<1x256xf32> to vector<8x256xf32>
    %10 = arith.addf %7, %9 : vector<8x256xf32>
    %cst_7 = arith.constant 0.000000e+00 : f32
    %11 = vector.broadcast %cst_7 : f32 to vector<8x256xf32>
    %12 = arith.subf %11, %10 : vector<8x256xf32>
    %13 = math.exp %12 : vector<8x256xf32>
    %cst_8 = arith.constant 1.000000e+00 : f32
    %14 = vector.broadcast %cst_8 : f32 to vector<8x256xf32>
    %15 = arith.addf %14, %13 : vector<8x256xf32>
    %cst_9 = arith.constant 1.000000e+00 : f32
    %16 = vector.broadcast %cst_9 : f32 to vector<8x256xf32>
    %17 = arith.divf %16, %15 : vector<8x256xf32>
    %c0_10 = arith.constant 0 : index
    %c0_11 = arith.constant 0 : index
    %18 = vector.load %arg4[%c0_10, %c0_11] : memref<8x256xf32, #tpu.memory_space<vmem>>, vector<8x256xf32>
    tpu.vector_store %arg4[%c0_10, %c0_11], %17 {strides = array<i32>} : memref<8x256xf32, #tpu.memory_space<vmem>>, vector<8x256xf32>,
    return
  }
}

</mosaic_0001>

<llo_original>
// kernel: fc1_forward.1
$region0: #{fc1_forward.1}
  #allocation0 [shape = 'u32[]', space=smem, size = 0x4, offset = 0x4, fixed_abs, tag = 'smem constant byte address 0x4 - core index']
  #allocation1 [shape = 'u32[72,128]{1,0:T(1,128)}', space=vmem, size = 0x9000, scoped, tag = 'internal scratch']
  %s0 = inlined_call_operand.hbm [shape: f32[8,384], index: 0, kind: input, shape index: {}]
  %s1 = inlined_call_operand.hbm [shape: s8[384,256], index: 1, kind: input, shape index: {}]
  %s2 = inlined_call_operand.hbm [shape: f32[1,256], index: 2, kind: input, shape index: {}]
  %s3 = inlined_call_operand.vmem [shape: f32[1,256], index: 3, kind: input, shape index: {}]
  %s4 = inlined_call_operand.hbm [shape: f32[8,256], index: 4, kind: output, shape index: {}]
  %s5 = sld [smem:[#allocation0]]
  $region38: #{fc1_forward.1} parent=0
    _
  %s7 = ssub.s32 1, %s5
  %s8 = scalar_select 0, %s7, %s5
  $region1: #{fc1_forward.1} parent=0
    #allocation2 [shape = 'u8[12288]{0}', space=vmem, size = 0x3000, scoped, tag = 'input window, operand 0, single buffered']
    #allocation3 [shape = 's32[1]{0}', space=sflag, size = 0x4, scoped, tag = 'scoped memory for fc1_forward.1']
    #allocation4 [shape = 's32[1]{0}', space=sflag, size = 0x4, scoped, tag = 'scoped memory for fc1_forward.1']
    #allocation5 [shape = 'u8[98304]{0}', space=vmem, size = 0x18000, scoped, tag = 'input window, operand 1, single buffered']
    #allocation6 [shape = 's32[1]{0}', space=sflag, size = 0x4, scoped, tag = 'scoped memory for fc1_forward.1']
    #allocation7 [shape = 'u8[1024]{0}', space=vmem, size = 0x400, scoped, tag = 'input window, operand 2, single buffered']
    #allocation8 [shape = 'u8[8192]{0}', space=vmem, size = 0x2000, scoped, tag = 'output window, operand 0, single buffered']
    %9 = vsyncpa [#allocation3], 0
    %10 = vsyncpa [#allocation6], 0
    %11 = vsyncpa [#allocation4], 0
    // Predicated region
    $region2: #{fc1_forward.1} parent=1 // pred_check
      _
    $region3: #{fc1_forward.1} parent=1 // pred_check_branch
      %13 = sbr.rel (0) target = $region5
    $region4: #{fc1_forward.1} parent=1 // pred_region
      %15 = vsyncadd [#allocation3], 0
      %s17 = sshll.u32 %s0, 4
      %s18 = int_to_ptr.hbm [resolvable:$true] %s17
      %s19 = sshll.u32 [#allocation2], 4
      %s20 = int_to_ptr.vmem [resolvable:$true] %s19
      %22 = dma.hbm_to_vmem [thread:$0]  %s18, 384, %s20, [#allocation3]
    $region5: #{fc1_forward.1} parent=1 // pred_fallthru
      _
    // Predicated region
    $region6: #{fc1_forward.1} parent=1 // pred_check
      _
    $region7: #{fc1_forward.1} parent=1 // pred_check_branch
      %24 = sbr.rel (0) target = $region9
    $region8: #{fc1_forward.1} parent=1 // pred_region
      %26 = vsyncadd [#allocation6], 0
      %s27 = sshll.u32 %s1, 4
      %s28 = int_to_ptr.hbm [resolvable:$true] %s27
      %s29 = sshll.u32 [#allocation5], 4
      %s30 = int_to_ptr.vmem [resolvable:$true] %s29
      %35 = dma.hbm_to_vmem [thread:$0]  %s28, 3072, %s30, [#allocation6], 256, 256, 16
    $region9: #{fc1_forward.1} parent=1 // pred_fallthru
      _
    // Predicated region
    $region10: #{fc1_forward.1} parent=1 // pred_check
      _
    $region11: #{fc1_forward.1} parent=1 // pred_check_branch
      %37 = sbr.rel (0) target = $region13
    $region12: #{fc1_forward.1} parent=1 // pred_region
      %39 = vsyncadd [#allocation6], 0
      %s41 = sshll.u32 %s2, 4
      %s42 = int_to_ptr.hbm [resolvable:$true] %s41
      %s43 = sshll.u32 [#allocation7], 4
      %s44 = int_to_ptr.vmem [resolvable:$true] %s43
      %46 = dma.hbm_to_vmem [thread:$0]  %s42, 32, %s44, [#allocation6]
    $region13: #{fc1_forward.1} parent=1 // pred_fallthru
      _
    // Predicated region
    $region14: #{fc1_forward.1} parent=1 // pred_check
      _
    $region15: #{fc1_forward.1} parent=1 // pred_check_branch
      %48 = sbr.rel (0) target = $region17
    $region16: #{fc1_forward.1} parent=1 // pred_region
      _
    $region17: #{fc1_forward.1} parent=1 // pred_fallthru
      _
    // Predicated region
    $region18: #{fc1_forward.1} parent=1 // pred_check
      _
    $region19: #{fc1_forward.1} parent=1 // pred_check_branch
      %50 = sbr.rel (0) target = $region21
    $region20: #{fc1_forward.1} parent=1 // pred_region
      %52 = dma.done [#allocation3], 384
    $region21: #{fc1_forward.1} parent=1 // pred_fallthru
      _
    // Predicated region
    $region22: #{fc1_forward.1} parent=1 // pred_check
      _
    $region23: #{fc1_forward.1} parent=1 // pred_check_branch
      %54 = sbr.rel (0) target = $region25
    $region24: #{fc1_forward.1} parent=1 // pred_region
      %56 = dma.done [#allocation6], 3072
    $region25: #{fc1_forward.1} parent=1 // pred_fallthru
      _
    // Predicated region
    $region26: #{fc1_forward.1} parent=1 // pred_check
      _
    $region27: #{fc1_forward.1} parent=1 // pred_check_branch
      %58 = sbr.rel (0) target = $region29
    $region28: #{fc1_forward.1} parent=1 // pred_region
      %60 = dma.done [#allocation6], 32
    $region29: #{fc1_forward.1} parent=1 // pred_fallthru
      _
    %v61 = vld [vmem:[#allocation2] sm:$0xff]
    %v62 = vld [vmem:[#allocation2 + $0x8] sm:$0xff]
    %v63 = vld [vmem:[#allocation2 + $0x10] sm:$0xff]
    %v64 = vpack.c.bf16 %v61, %v61
    %v65 = vpack.c.bf16 %v62, %v62
    %v66 = vpack.c.bf16 %v63, %v63
    %v67 = vld [vmem:[#allocation5] sm:$0xff]
    %v68 = vld [vmem:[#allocation5 + $0x8] sm:$0xff]
    %v69 = vld [vmem:[#allocation5 + $0x10] sm:$0xff]
    %v70 = vld [vmem:[#allocation5 + $0x18] sm:$0xff]
    %v71 = vld [vmem:[#allocation5 + $0x20] sm:$0xff]
    %v72 = vld [vmem:[#allocation5 + $0x28] sm:$0xff]
    %v73 = vld [vmem:[#allocation5 + $0x30] sm:$0xff]
    %v74 = vld [vmem:[#allocation5 + $0x38] sm:$0xff]
    %v75 = vld [vmem:[#allocation5 + $0x40] sm:$0xff]
    %v76 = vld [vmem:[#allocation5 + $0x48] sm:$0xff]
    %v77 = vld [vmem:[#allocation5 + $0x50] sm:$0xff]
    %v78 = vld [vmem:[#allocation5 + $0x58] sm:$0xff]
    %v79 = vld [vmem:[#allocation5 + $0x60] sm:$0xff]
    %v80 = vld [vmem:[#allocation5 + $0x68] sm:$0xff]
    %v81 = vld [vmem:[#allocation5 + $0x70] sm:$0xff]
    %v82 = vld [vmem:[#allocation5 + $0x78] sm:$0xff]
    %v83 = vld [vmem:[#allocation5 + $0x80] sm:$0xff]
    %v84 = vld [vmem:[#allocation5 + $0x88] sm:$0xff]
    %v85 = vld [vmem:[#allocation5 + $0x90] sm:$0xff]
    %v86 = vld [vmem:[#allocation5 + $0x98] sm:$0xff]
    %v87 = vld [vmem:[#allocation5 + $0xa0] sm:$0xff]
    %v88 = vld [vmem:[#allocation5 + $0xa8] sm:$0xff]
    %v89 = vld [vmem:[#allocation5 + $0xb0] sm:$0xff]
    %v90 = vld [vmem:[#allocation5 + $0xb8] sm:$0xff]
    %v91 = vunpack.c.0.s8 %v67
    %v92 = vunpack.c.0.s8 %v68
    %v93 = vunpack.c.1.s8 %v67
    %v94 = vunpack.c.1.s8 %v68
    %v95 = vunpack.c.2.s8 %v67
    %v96 = vunpack.c.2.s8 %v68
    %v97 = vunpack.c.3.s8 %v67
    %v98 = vunpack.c.3.s8 %v68
    %v99 = vunpack.c.0.s8 %v69
    %v100 = vunpack.c.0.s8 %v70
    %v101 = vunpack.c.1.s8 %v69
    %v102 = vunpack.c.1.s8 %v70
    %v103 = vunpack.c.2.s8 %v69
    %v104 = vunpack.c.2.s8 %v70
    %v105 = vunpack.c.3.s8 %v69
    %v106 = vunpack.c.3.s8 %v70
    %v107 = vunpack.c.0.s8 %v71
    %v108 = vunpack.c.0.s8 %v72
    %v109 = vunpack.c.1.s8 %v71
    %v110 = vunpack.c.1.s8 %v72
    %v111 = vunpack.c.2.s8 %v71
    %v112 = vunpack.c.2.s8 %v72
    %v113 = vunpack.c.3.s8 %v71
    %v114 = vunpack.c.3.s8 %v72
    %v115 = vunpack.c.0.s8 %v73
    %v116 = vunpack.c.0.s8 %v74
    %v117 = vunpack.c.1.s8 %v73
    %v118 = vunpack.c.1.s8 %v74
    %v119 = vunpack.c.2.s8 %v73
    %v120 = vunpack.c.2.s8 %v74
    %v121 = vunpack.c.3.s8 %v73
    %v122 = vunpack.c.3.s8 %v74
    %v123 = vunpack.c.0.s8 %v75
    %v124 = vunpack.c.0.s8 %v76
    %v125 = vunpack.c.1.s8 %v75
    %v126 = vunpack.c.1.s8 %v76
    %v127 = vunpack.c.2.s8 %v75
    %v128 = vunpack.c.2.s8 %v76
    %v129 = vunpack.c.3.s8 %v75
    %v130 = vunpack.c.3.s8 %v76
    %v131 = vunpack.c.0.s8 %v77
    %v132 = vunpack.c.0.s8 %v78
    %v133 = vunpack.c.1.s8 %v77
    %v134 = vunpack.c.1.s8 %v78
    %v135 = vunpack.c.2.s8 %v77
    %v136 = vunpack.c.2.s8 %v78
    %v137 = vunpack.c.3.s8 %v77
    %v138 = vunpack.c.3.s8 %v78
    %v139 = vunpack.c.0.s8 %v79
    %v140 = vunpack.c.0.s8 %v80
    %v141 = vunpack.c.1.s8 %v79
    %v142 = vunpack.c.1.s8 %v80
    %v143 = vunpack.c.2.s8 %v79
    %v144 = vunpack.c.2.s8 %v80
    %v145 = vunpack.c.3.s8 %v79
    %v146 = vunpack.c.3.s8 %v80
    %v147 = vunpack.c.0.s8 %v81
    %v148 = vunpack.c.0.s8 %v82
    %v149 = vunpack.c.1.s8 %v81
    %v150 = vunpack.c.1.s8 %v82
    %v151 = vunpack.c.2.s8 %v81
    %v152 = vunpack.c.2.s8 %v82
    %v153 = vunpack.c.3.s8 %v81
    %v154 = vunpack.c.3.s8 %v82
    %v155 = vunpack.c.0.s8 %v83
    %v156 = vunpack.c.0.s8 %v84
    %v157 = vunpack.c.1.s8 %v83
    %v158 = vunpack.c.1.s8 %v84
    %v159 = vunpack.c.2.s8 %v83
    %v160 = vunpack.c.2.s8 %v84
    %v161 = vunpack.c.3.s8 %v83
    %v162 = vunpack.c.3.s8 %v84
    %v163 = vunpack.c.0.s8 %v85
    %v164 = vunpack.c.0.s8 %v86
    %v165 = vunpack.c.1.s8 %v85
    %v166 = vunpack.c.1.s8 %v86
    %v167 = vunpack.c.2.s8 %v85
    %v168 = vunpack.c.2.s8 %v86
    %v169 = vunpack.c.3.s8 %v85
    %v170 = vunpack.c.3.s8 %v86
    %v171 = vunpack.c.0.s8 %v87
    %v172 = vunpack.c.0.s8 %v88
    %v173 = vunpack.c.1.s8 %v87
    %v174 = vunpack.c.1.s8 %v88
    %v175 = vunpack.c.2.s8 %v87
    %v176 = vunpack.c.2.s8 %v88
    %v177 = vunpack.c.3.s8 %v87
    %v178 = vunpack.c.3.s8 %v88
    %v179 = vunpack.c.0.s8 %v89
    %v180 = vunpack.c.0.s8 %v90
    %v181 = vunpack.c.1.s8 %v89
    %v182 = vunpack.c.1.s8 %v90
    %v183 = vunpack.c.2.s8 %v89
    %v184 = vunpack.c.2.s8 %v90
    %v185 = vunpack.c.3.s8 %v89
    %v186 = vunpack.c.3.s8 %v90
    %v187 = vcvt.s32.f32 %v91
    %v188 = vcvt.s32.f32 %v92
    %v189 = vcvt.s32.f32 %v93
    %v190 = vcvt.s32.f32 %v94
    %v191 = vcvt.s32.f32 %v95
    %v192 = vcvt.s32.f32 %v96
    %v193 = vcvt.s32.f32 %v97
    %v194 = vcvt.s32.f32 %v98
    %v195 = vcvt.s32.f32 %v99
    %v196 = vcvt.s32.f32 %v100
    %v197 = vcvt.s32.f32 %v101
    %v198 = vcvt.s32.f32 %v102
    %v199 = vcvt.s32.f32 %v103
    %v200 = vcvt.s32.f32 %v104
    %v201 = vcvt.s32.f32 %v105
    %v202 = vcvt.s32.f32 %v106
    %v203 = vcvt.s32.f32 %v107
    %v204 = vcvt.s32.f32 %v108
    %v205 = vcvt.s32.f32 %v109
    %v206 = vcvt.s32.f32 %v110
    %v207 = vcvt.s32.f32 %v111
    %v208 = vcvt.s32.f32 %v112
    %v209 = vcvt.s32.f32 %v113
    %v210 = vcvt.s32.f32 %v114
    %v211 = vcvt.s32.f32 %v115
    %v212 = vcvt.s32.f32 %v116
    %v213 = vcvt.s32.f32 %v117
    %v214 = vcvt.s32.f32 %v118
    %v215 = vcvt.s32.f32 %v119
    %v216 = vcvt.s32.f32 %v120
    %v217 = vcvt.s32.f32 %v121
    %v218 = vcvt.s32.f32 %v122
    %v219 = vcvt.s32.f32 %v123
    %v220 = vcvt.s32.f32 %v124
    %v221 = vcvt.s32.f32 %v125
    %v222 = vcvt.s32.f32 %v126
    %v223 = vcvt.s32.f32 %v127
    %v224 = vcvt.s32.f32 %v128
    %v225 = vcvt.s32.f32 %v129
    %v226 = vcvt.s32.f32 %v130
    %v227 = vcvt.s32.f32 %v131
    %v228 = vcvt.s32.f32 %v132
    %v229 = vcvt.s32.f32 %v133
    %v230 = vcvt.s32.f32 %v134
    %v231 = vcvt.s32.f32 %v135
    %v232 = vcvt.s32.f32 %v136
    %v233 = vcvt.s32.f32 %v137
    %v234 = vcvt.s32.f32 %v138
    %v235 = vcvt.s32.f32 %v139
    %v236 = vcvt.s32.f32 %v140
    %v237 = vcvt.s32.f32 %v141
    %v238 = vcvt.s32.f32 %v142
    %v239 = vcvt.s32.f32 %v143
    %v240 = vcvt.s32.f32 %v144
    %v241 = vcvt.s32.f32 %v145
    %v242 = vcvt.s32.f32 %v146
    %v243 = vcvt.s32.f32 %v147
    %v244 = vcvt.s32.f32 %v148
    %v245 = vcvt.s32.f32 %v149
    %v246 = vcvt.s32.f32 %v150
    %v247 = vcvt.s32.f32 %v151
    %v248 = vcvt.s32.f32 %v152
    %v249 = vcvt.s32.f32 %v153
    %v250 = vcvt.s32.f32 %v154
    %v251 = vcvt.s32.f32 %v155
    %v252 = vcvt.s32.f32 %v156
    %v253 = vcvt.s32.f32 %v157
    %v254 = vcvt.s32.f32 %v158
    %v255 = vcvt.s32.f32 %v159
    %v256 = vcvt.s32.f32 %v160
    %v257 = vcvt.s32.f32 %v161
    %v258 = vcvt.s32.f32 %v162
    %v259 = vcvt.s32.f32 %v163
    %v260 = vcvt.s32.f32 %v164
    %v261 = vcvt.s32.f32 %v165
    %v262 = vcvt.s32.f32 %v166
    %v263 = vcvt.s32.f32 %v167
    %v264 = vcvt.s32.f32 %v168
    %v265 = vcvt.s32.f32 %v169
    %v266 = vcvt.s32.f32 %v170
    %v267 = vcvt.s32.f32 %v171
    %v268 = vcvt.s32.f32 %v172
    %v269 = vcvt.s32.f32 %v173
    %v270 = vcvt.s32.f32 %v174
    %v271 = vcvt.s32.f32 %v175
    %v272 = vcvt.s32.f32 %v176
    %v273 = vcvt.s32.f32 %v177
    %v274 = vcvt.s32.f32 %v178
    %v275 = vcvt.s32.f32 %v179
    %v276 = vcvt.s32.f32 %v180
    %v277 = vcvt.s32.f32 %v181
    %v278 = vcvt.s32.f32 %v182
    %v279 = vcvt.s32.f32 %v183
    %v280 = vcvt.s32.f32 %v184
    %v281 = vcvt.s32.f32 %v185
    %v282 = vcvt.s32.f32 %v186
    %v283 = vpack.c.bf16 %v189, %v187
    %v284 = vpack.c.bf16 %v190, %v188
    %v285 = vpack.c.bf16 %v193, %v191
    %v286 = vpack.c.bf16 %v194, %v192
    %v287 = vpack.c.bf16 %v197, %v195
    %v288 = vpack.c.bf16 %v198, %v196
    %v289 = vpack.c.bf16 %v201, %v199
    %v290 = vpack.c.bf16 %v202, %v200
    %v291 = vpack.c.bf16 %v205, %v203
    %v292 = vpack.c.bf16 %v206, %v204
    %v293 = vpack.c.bf16 %v209, %v207
    %v294 = vpack.c.bf16 %v210, %v208
    %v295 = vpack.c.bf16 %v213, %v211
    %v296 = vpack.c.bf16 %v214, %v212
    %v297 = vpack.c.bf16 %v217, %v215
    %v298 = vpack.c.bf16 %v218, %v216
    %v299 = vpack.c.bf16 %v221, %v219
    %v300 = vpack.c.bf16 %v222, %v220
    %v301 = vpack.c.bf16 %v225, %v223
    %v302 = vpack.c.bf16 %v226, %v224
    %v303 = vpack.c.bf16 %v229, %v227
    %v304 = vpack.c.bf16 %v230, %v228
    %v305 = vpack.c.bf16 %v233, %v231
    %v306 = vpack.c.bf16 %v234, %v232
    %v307 = vpack.c.bf16 %v237, %v235
    %v308 = vpack.c.bf16 %v238, %v236
    %v309 = vpack.c.bf16 %v241, %v239
    %v310 = vpack.c.bf16 %v242, %v240
    %v311 = vpack.c.bf16 %v245, %v243
    %v312 = vpack.c.bf16 %v246, %v244
    %v313 = vpack.c.bf16 %v249, %v247
    %v314 = vpack.c.bf16 %v250, %v248
    %v315 = vpack.c.bf16 %v253, %v251
    %v316 = vpack.c.bf16 %v254, %v252
    %v317 = vpack.c.bf16 %v257, %v255
    %v318 = vpack.c.bf16 %v258, %v256
    %v319 = vpack.c.bf16 %v261, %v259
    %v320 = vpack.c.bf16 %v262, %v260
    %v321 = vpack.c.bf16 %v265, %v263
    %v322 = vpack.c.bf16 %v266, %v264
    %v323 = vpack.c.bf16 %v269, %v267
    %v324 = vpack.c.bf16 %v270, %v268
    %v325 = vpack.c.bf16 %v273, %v271
    %v326 = vpack.c.bf16 %v274, %v272
    %v327 = vpack.c.bf16 %v277, %v275
    %v328 = vpack.c.bf16 %v278, %v276
    %v329 = vpack.c.bf16 %v281, %v279
    %v330 = vpack.c.bf16 %v282, %v280
    %331 = vmatpush.bf16.msra.mxu0 %v297
    %332 = vmatpush.bf16.msra.mxu0 %v295
    %333 = vmatpush.bf16.msra.mxu0 %v293
    %334 = vmatpush.bf16.msra.mxu0 %v291
    %335 = vmatpush.bf16.msra.mxu0 %v289
    %336 = vmatpush.bf16.msra.mxu0 %v287
    %337 = vmatpush.bf16.msra.mxu0 %v285
    %338 = vmatpush.bf16.msra.mxu0 %v283
    %339 = vmatmul.bf16.gmra.mxu0 %v64
    %v340 = vpop.f32.mrf.mxu0
    %v341 = vadd.f32 0.0, %v340
    %v342 = vpop.f32.mrf.mxu0
    %343 = vdwg.mxu0
    %344 = vmatpush.bf16.msra.mxu0 %v313
    %345 = vmatpush.bf16.msra.mxu0 %v311
    %346 = vmatpush.bf16.msra.mxu0 %v309
    %347 = vmatpush.bf16.msra.mxu0 %v307
    %348 = vmatpush.bf16.msra.mxu0 %v305
    %349 = vmatpush.bf16.msra.mxu0 %v303
    %350 = vmatpush.bf16.msra.mxu0 %v301
    %351 = vmatpush.bf16.msra.mxu0 %v299
    %352 = vmatmul.bf16.gmra.mxu0 %v65
    %v353 = vpop.f32.mrf.mxu0
    %v354 = vadd.f32 %v341, %v353
    %v355 = vpop.f32.mrf.mxu0
    %356 = vdwg.mxu0
    %357 = vmatpush.bf16.msra.mxu0 %v329
    %358 = vmatpush.bf16.msra.mxu0 %v327
    %359 = vmatpush.bf16.msra.mxu0 %v325
    %360 = vmatpush.bf16.msra.mxu0 %v323
    %361 = vmatpush.bf16.msra.mxu0 %v321
    %362 = vmatpush.bf16.msra.mxu0 %v319
    %363 = vmatpush.bf16.msra.mxu0 %v317
    %364 = vmatpush.bf16.msra.mxu0 %v315
    %365 = vmatmul.bf16.gmra.mxu0 %v66
    %v366 = vpop.f32.mrf.mxu0
    %v367 = vadd.f32 %v354, %v366
    %v368 = vpop.f32.mrf.mxu0
    %369 = vdwg.mxu0
    %370 = vmatpush.bf16.msra.mxu0 %v298
    %371 = vmatpush.bf16.msra.mxu0 %v296
    %372 = vmatpush.bf16.msra.mxu0 %v294
    %373 = vmatpush.bf16.msra.mxu0 %v292
    %374 = vmatpush.bf16.msra.mxu0 %v290
    %375 = vmatpush.bf16.msra.mxu0 %v288
    %376 = vmatpush.bf16.msra.mxu0 %v286
    %377 = vmatpush.bf16.msra.mxu0 %v284
    %378 = vmatmul.bf16.gmra.mxu0 %v64
    %v379 = vpop.f32.mrf.mxu0
    %v380 = vadd.f32 0.0, %v379
    %v381 = vpop.f32.mrf.mxu0
    %382 = vdwg.mxu0
    %383 = vmatpush.bf16.msra.mxu0 %v314
    %384 = vmatpush.bf16.msra.mxu0 %v312
    %385 = vmatpush.bf16.msra.mxu0 %v310
    %386 = vmatpush.bf16.msra.mxu0 %v308
    %387 = vmatpush.bf16.msra.mxu0 %v306
    %388 = vmatpush.bf16.msra.mxu0 %v304
    %389 = vmatpush.bf16.msra.mxu0 %v302
    %390 = vmatpush.bf16.msra.mxu0 %v300
    %391 = vmatmul.bf16.gmra.mxu0 %v65
    %v392 = vpop.f32.mrf.mxu0
    %v393 = vadd.f32 %v380, %v392
    %v394 = vpop.f32.mrf.mxu0
    %395 = vdwg.mxu0
    %396 = vmatpush.bf16.msra.mxu0 %v330
    %397 = vmatpush.bf16.msra.mxu0 %v328
    %398 = vmatpush.bf16.msra.mxu0 %v326
    %399 = vmatpush.bf16.msra.mxu0 %v324
    %400 = vmatpush.bf16.msra.mxu0 %v322
    %401 = vmatpush.bf16.msra.mxu0 %v320
    %402 = vmatpush.bf16.msra.mxu0 %v318
    %403 = vmatpush.bf16.msra.mxu0 %v316
    %404 = vmatmul.bf16.gmra.mxu0 %v66
    %v405 = vpop.f32.mrf.mxu0
    %v406 = vadd.f32 %v393, %v405
    %v407 = vpop.f32.mrf.mxu0
    %408 = vdwg.mxu0
    %v409 = vld [vmem:[#allocation7] sm:$0x3]
    %v411 = vperm.slane %v409, 0
    %v412 = vperm.slane %v409, 1
    %v415 = vmul.f32 %v367, %v411
    %v416 = vmul.f32 %v406, %v412
    %v417 = vld [vmem:[%s3] sm:$0x3]
    %v419 = vperm.slane %v417, 0
    %v420 = vperm.slane %v417, 1
    %v423 = vadd.f32 %v415, %v419
    %v424 = vadd.f32 %v416, %v420
    %v425 = vsub.f32 0.0, %v423
    %v426 = vsub.f32 0.0, %v424
    %v427 = vmul.f32 %v425, 1.442695
    %v428 = vpow.pop %v427
    %v429 = vmul.f32 %v426, 1.442695
    %v430 = vpow.pop %v429
    %v431 = vadd.f32 %v428, 1.0
    %v432 = vadd.f32 %v430, 1.0
    %v433 = vrcp.pop %v431
    %v434 = vmul.f32 %v431, %v433
    %v435 = vsub.f32 1.0, %v434
    %v436 = vmul.f32 %v433, %v435
    %v437 = vadd.f32 %v433, %v436
    %vm438 = vweird.f32 %v431
    %vm439 = vweird.f32 %v433
    %vm440 = vmor %vm438, %vm439
    %v441 = vsel %vm440, %v433, %v437
    %v442 = vand.u32 2147483647, %v431
    %vm443 = vcmp.eq.f32.partialorder %v442, 8.507059e+37
    %v444 = vand.u32 %v431, 2147483648
    %v445 = vor.u32 1.1754944e-38, %v444
    %v446 = vsel %vm443, %v445, %v441
    %v447 = vmul.f32 1.0, %v446
    %v448 = vrcp.pop %v432
    %v449 = vmul.f32 %v432, %v448
    %v450 = vsub.f32 1.0, %v449
    %v451 = vmul.f32 %v448, %v450
    %v452 = vadd.f32 %v448, %v451
    %vm453 = vweird.f32 %v432
    %vm454 = vweird.f32 %v448
    %vm455 = vmor %vm453, %vm454
    %v456 = vsel %vm455, %v448, %v452
    %v457 = vand.u32 2147483647, %v432
    %vm458 = vcmp.eq.f32.partialorder %v457, 8.507059e+37
    %v459 = vand.u32 %v432, 2147483648
    %v460 = vor.u32 1.1754944e-38, %v459
    %v461 = vsel %vm458, %v460, %v456
    %v462 = vmul.f32 1.0, %v461
    %463 = vst [vmem:[#allocation8] sm:$0xff] %v447
    %464 = vst [vmem:[#allocation8 + $0x8] sm:$0xff] %v462
    // Predicated region
    $region30: #{fc1_forward.1} parent=1 // pred_check
      _
    $region31: #{fc1_forward.1} parent=1 // pred_check_branch
      %466 = sbr.rel (0) target = $region33
    $region32: #{fc1_forward.1} parent=1 // pred_region
      %468 = vsyncadd [#allocation4], 0
      %s470 = sshll.u32 [#allocation8], 4
      %s471 = int_to_ptr.vmem [resolvable:$true] %s470
      %s472 = sshll.u32 %s4, 4
      %s473 = int_to_ptr.hbm [resolvable:$true] %s472
      %475 = dma.vmem_to_hbm [thread:$0]  %s471, 256, %s473, [#allocation4]
    $region33: #{fc1_forward.1} parent=1 // pred_fallthru
      _
    // Predicated region
    $region34: #{fc1_forward.1} parent=1 // pred_check
      _
    $region35: #{fc1_forward.1} parent=1 // pred_check_branch
      %477 = sbr.rel (0) target = $region37
    $region36: #{fc1_forward.1} parent=1 // pred_region
      %479 = dma.done [#allocation4], 256
    $region37: #{fc1_forward.1} parent=1 // pred_fallthru
      _
    %480 = vsyncpa [#allocation3], 1
    %481 = vsyncpa [#allocation6], 1
    %482 = vsyncpa [#allocation4], 1

</llo_original>
